<compile_context>
chip_gen: v7x
topology: tpu7x:2x2x1
jax: 0.10.0
libtpu: 0.0.40
codegen_flags: <defaults>
</compile_context>

<pallas_src>
import functools

import jax
import jax.numpy as jnp
from jax.experimental import pallas as pl
from jax.experimental.pallas import tpu as pltpu

_LANE = 128


def _focal_loss_kernel(pred_ref, mask_ref, out_ref, *,
                       alpha, gamma, num_classes, min_clamp, max_clamp):
    # pred_ref: (1, C, TS, 128) logits
    # mask_ref: (1, TS, 128)    int8 class ids
    # out_ref : (1, TS, 128)    float32 loss
    mask = mask_ref[0].astype(jnp.int32)                       # (TS, 128)

    # ---- softmax over classes, unrolled elementwise (no XLU reduce) ----
    xs = [pred_ref[0, c].astype(jnp.float32) for c in range(num_classes)]
    m = xs[0]
    for c in range(1, num_classes):
        m = jnp.maximum(m, xs[c])
    es = [jnp.exp(x - m) for x in xs]                          # C EUP exps
    denom = es[0]
    for c in range(1, num_classes):
        denom = denom + es[c]

    # ---- gather the true-class numerator / alpha via selects ----
    e_true = es[0]
    a_true = jnp.full_like(m, float(alpha[0]))
    for c in range(1, num_classes):
        sel = mask == c
        e_true = jnp.where(sel, es[c], e_true)
        a_true = jnp.where(sel, float(alpha[c]), a_true)

    p_true = e_true / denom                                    # one divide
    p_true = jnp.clip(p_true, min_clamp, max_clamp)            # clip only p_true

    one_minus = 1.0 - p_true
    g = float(gamma)
    if g == 2.0:
        focal = one_minus * one_minus                          # VPU only
    elif g == int(g) and 0 <= int(g) <= 4:
        focal = jnp.ones_like(one_minus)
        for _ in range(int(g)):
            focal = focal * one_minus
    else:
        focal = one_minus ** g                                 # general gamma

    # only the true class survives the one-hot product in the reference
    out_ref[0] = -a_true * focal * jnp.log(p_true)             # one EUP log


def categorical_focal_loss(pred, mask, alpha, gamma, num_classes=3,
                           block_sublanes=1024):
    """pred: (B, C, H, W) float logits; mask: (B, 1, H, W) int labels.

    Returns float32 loss of shape (B, H, W) (== PyTorch loss.sum(dim=1))."""
    B, C, H, W = pred.shape
    assert C == num_classes
    N = H * W

    # sublane-tile size: multiple of 32 (int8 native tiling), capped by need
    ns = pl.cdiv(N, _LANE)
    ts = min(block_sublanes, ns)
    ts = ((ts + 31) // 32) * 32
    NS = ((ns + ts - 1) // ts) * ts          # total sublanes (multiple of ts)
    N_pad = NS * _LANE
    n_blocks = NS // ts

    pred_f = pred.reshape(B, C, N)
    mask_f = mask.reshape(B, N).astype(jnp.int8)   # int8 labels -> fewer HBM bytes
    if N_pad != N:
        pred_f = jnp.pad(pred_f, ((0, 0), (0, 0), (0, N_pad - N)))
        mask_f = jnp.pad(mask_f, ((0, 0), (0, N_pad - N)))
    pred_f = pred_f.reshape(B, C, NS, _LANE)       # (8,128)-dense planes
    mask_f = mask_f.reshape(B, NS, _LANE)

    kernel = functools.partial(
        _focal_loss_kernel,
        alpha=tuple(float(a) for a in alpha),      # baked-in constants
        gamma=float(gamma),
        num_classes=num_classes,
        min_clamp=1e-8,
        max_clamp=1.0 - 1e-8,
    )

    out = pl.pallas_call(
        kernel,
        out_shape=jax.ShapeDtypeStruct((B, NS, _LANE), jnp.float32),
        grid=(B, n_blocks),
        in_specs=[
            pl.BlockSpec((1, C, ts, _LANE), lambda b, n: (b, 0, n, 0)),  # logits
            pl.BlockSpec((1, ts, _LANE), lambda b, n: (b, n, 0)),        # labels
        ],
        out_specs=pl.BlockSpec((1, ts, _LANE), lambda b, n: (b, n, 0)),
        compiler_params=pltpu.CompilerParams(
            dimension_semantics=("parallel", "parallel")),
    )(pred_f, mask_f)

    return out.reshape(B, N_pad)[:, :N].reshape(B, H, W)


def _reference(pred, mask, alpha, gamma, num_classes):
    # Pure-JAX replica of the PyTorch forward, for a sanity check.
    p = jax.nn.softmax(pred.astype(jnp.float32), axis=1)
    p = jnp.clip(p, 1e-8, 1.0 - 1e-8)
    onehot = jax.nn.one_hot(mask[:, 0], num_classes, dtype=p.dtype)   # (B,H,W,C)
    onehot = jnp.transpose(onehot, (0, 3, 1, 2))                      # (B,C,H,W)
    ce = -onehot * jnp.log(p)
    a = jnp.asarray(alpha, p.dtype).reshape(1, num_classes, 1, 1)
    loss = a * (1.0 - p) ** gamma * ce
    return loss.sum(axis=1)


if __name__ == "__main__":
    key = jax.random.PRNGKey(0)
    B, C, H, W = 2, 3, 16, 16

    # Deterministic "module params" (alpha / gamma are __init__ args).
    alpha = [0.25, 0.5, 0.25]
    gamma = 2.0

    k1, k2 = jax.random.split(key)
    pred = jax.random.normal(k1, (B, C, H, W), dtype=jnp.float32)
    mask = jax.random.randint(k2, (B, 1, H, W), 0, C, dtype=jnp.int32)

    loss = categorical_focal_loss(pred, mask, alpha, gamma, num_classes=C)
    jax.block_until_ready(loss)

    ref = _reference(pred, mask, alpha, gamma, C)
    assert loss.shape == (B, H, W)
    assert loss.dtype == jnp.float32
    assert jnp.allclose(loss, ref, atol=1e-5, rtol=1e-5)

    print("KERNEL_OK")
</pallas_src>

<mosaic_0001>
module attributes {stable_mosaic.version = 11 : i64} {
  func.func @_focal_loss_kernel(%arg0: i32, %arg1: i32, %arg2: memref<1x3x32x128xf32, #tpu.memory_space<vmem>>, %arg3: memref<1x32x128xi8, #tpu.memory_space<vmem>>, %arg4: memref<1x32x128xf32, #tpu.memory_space<vmem>>) attributes {dimension_semantics = [#tpu.dimension_semantics<parallel>, #tpu.dimension_semantics<parallel>], iteration_bounds = array<i64: 2, 1>, scalar_prefetch = 0 : i64, scratch_operands = 0 : i64, tpu.core_type = #tpu.core_type<tc>, window_params = [{transform_indices = @transform_0, window_bounds = array<i64: 1, 3, 32, 128>}, {transform_indices = @transform_1, window_bounds = array<i64: 1, 32, 128>}, {transform_indices = @transform_2, window_bounds = array<i64: 1, 32, 128>}]} {
    %c0 = arith.constant 0 : index
    %c0_0 = arith.constant 0 : index
    %c0_1 = arith.constant 0 : index
    %0 = vector.load %arg3[%c0, %c0_0, %c0_1] : memref<1x32x128xi8, #tpu.memory_space<vmem>>, vector<1x32x128xi8>
    %1 = vector.shape_cast %0 : vector<1x32x128xi8> to vector<32x128xi8>
    %2 = arith.extsi %1 : vector<32x128xi8> to vector<32x128xi32>
    %c0_2 = arith.constant 0 : index
    %c0_3 = arith.constant 0 : index
    %c0_4 = arith.constant 0 : index
    %c0_5 = arith.constant 0 : index
    %3 = vector.load %arg2[%c0_2, %c0_3, %c0_4, %c0_5] : memref<1x3x32x128xf32, #tpu.memory_space<vmem>>, vector<1x1x32x128xf32>
    %4 = vector.shape_cast %3 : vector<1x1x32x128xf32> to vector<32x128xf32>
    %c0_6 = arith.constant 0 : index
    %c1 = arith.constant 1 : index
    %c0_7 = arith.constant 0 : index
    %c0_8 = arith.constant 0 : index
    %5 = vector.load %arg2[%c0_6, %c1, %c0_7, %c0_8] : memref<1x3x32x128xf32, #tpu.memory_space<vmem>>, vector<1x1x32x128xf32>
    %6 = vector.shape_cast %5 : vector<1x1x32x128xf32> to vector<32x128xf32>
    %c0_9 = arith.constant 0 : index
    %c2 = arith.constant 2 : index
    %c0_10 = arith.constant 0 : index
    %c0_11 = arith.constant 0 : index
    %7 = vector.load %arg2[%c0_9, %c2, %c0_10, %c0_11] : memref<1x3x32x128xf32, #tpu.memory_space<vmem>>, vector<1x1x32x128xf32>
    %8 = vector.shape_cast %7 : vector<1x1x32x128xf32> to vector<32x128xf32>
    %9 = arith.maximumf %4, %6 : vector<32x128xf32>
    %10 = arith.maximumf %9, %8 : vector<32x128xf32>
    %11 = arith.subf %4, %10 : vector<32x128xf32>
    %12 = math.exp %11 : vector<32x128xf32>
    %13 = arith.subf %6, %10 : vector<32x128xf32>
    %14 = math.exp %13 : vector<32x128xf32>
    %15 = arith.subf %8, %10 : vector<32x128xf32>
    %16 = math.exp %15 : vector<32x128xf32>
    %17 = arith.addf %12, %14 : vector<32x128xf32>
    %18 = arith.addf %17, %16 : vector<32x128xf32>
    %cst = arith.constant 2.500000e-01 : f32
    %19 = vector.broadcast %cst : f32 to vector<32x128xf32>
    %c1_i32 = arith.constant 1 : i32
    %20 = vector.broadcast %c1_i32 : i32 to vector<32x128xi32>
    %21 = arith.cmpi eq, %2, %20 : vector<32x128xi32>
    %22 = arith.select %21, %14, %12 : vector<32x128xi1>, vector<32x128xf32>
    %cst_12 = arith.constant 5.000000e-01 : f32
    %23 = vector.broadcast %cst_12 : f32 to vector<32x128xf32>
    %24 = arith.select %21, %23, %19 : vector<32x128xi1>, vector<32x128xf32>
    %c2_i32 = arith.constant 2 : i32
    %25 = vector.broadcast %c2_i32 : i32 to vector<32x128xi32>
    %26 = arith.cmpi eq, %2, %25 : vector<32x128xi32>
    %27 = arith.select %26, %16, %22 : vector<32x128xi1>, vector<32x128xf32>
    %cst_13 = arith.constant 2.500000e-01 : f32
    %28 = vector.broadcast %cst_13 : f32 to vector<32x128xf32>
    %29 = arith.select %26, %28, %24 : vector<32x128xi1>, vector<32x128xf32>
    %30 = arith.divf %27, %18 : vector<32x128xf32>
    %cst_14 = arith.constant 9.99999993E-9 : f32
    %cst_15 = arith.constant 1.000000e+00 : f32
    %31 = vector.broadcast %cst_14 : f32 to vector<32x128xf32>
    %32 = arith.maximumf %31, %30 : vector<32x128xf32>
    %33 = vector.broadcast %cst_15 : f32 to vector<32x128xf32>
    %34 = arith.minimumf %33, %32 : vector<32x128xf32>
    %cst_16 = arith.constant 1.000000e+00 : f32
    %35 = vector.broadcast %cst_16 : f32 to vector<32x128xf32>
    %36 = arith.subf %35, %34 : vector<32x128xf32>
    %37 = arith.mulf %36, %36 : vector<32x128xf32>
    %cst_17 = arith.constant 0.000000e+00 : f32
    %38 = vector.broadcast %cst_17 : f32 to vector<32x128xf32>
    %39 = arith.subf %38, %29 : vector<32x128xf32>
    %40 = arith.mulf %39, %37 : vector<32x128xf32>
    %41 = math.log %34 : vector<32x128xf32>
    %42 = arith.mulf %40, %41 : vector<32x128xf32>
    %c0_18 = arith.constant 0 : index
    %c0_19 = arith.constant 0 : index
    %c0_20 = arith.constant 0 : index
    %43 = vector.load %arg4[%c0_18, %c0_19, %c0_20] : memref<1x32x128xf32, #tpu.memory_space<vmem>>, vector<1x32x128xf32>
    %44 = vector.shape_cast %43 : vector<1x32x128xf32> to vector<32x128xf32>
    %45 = vector.shape_cast %42 : vector<32x128xf32> to vector<1x32x128xf32>
    tpu.vector_store %arg4[%c0_18, %c0_19, %c0_20], %45 {strides = array<i32>} : memref<1x32x128xf32, #tpu.memory_space<vmem>>, vector<1x32x128xf32>,
    return
  }
  func.func @transform_0(%arg0: i32, %arg1: i32) -> (i32, i32, i32, i32) {
    %c0_i32 = arith.constant 0 : i32
    %c0_i32_0 = arith.constant 0 : i32
    %c0_i32_1 = arith.constant 0 : i32
    return %arg0, %c0_i32, %arg1, %c0_i32_0 : i32, i32, i32, i32
  }
  func.func @transform_1(%arg0: i32, %arg1: i32) -> (i32, i32, i32) {
    %c0_i32 = arith.constant 0 : i32
    %c0_i32_0 = arith.constant 0 : i32
    return %arg0, %arg1, %c0_i32 : i32, i32, i32
  }
  func.func @transform_2(%arg0: i32, %arg1: i32) -> (i32, i32, i32) {
    %c0_i32 = arith.constant 0 : i32
    %c0_i32_0 = arith.constant 0 : i32
    return %arg0, %arg1, %c0_i32 : i32, i32, i32
  }
}

</mosaic_0001>

<llo_original>
// kernel: tpu_custom_call.1
$region0: #{tpu_custom_call.1}
  #allocation0 [shape = 'u32[]', space=smem, size = 0x4, offset = 0x4, fixed_abs, tag = 'smem constant byte address 0x4 - core index']
  #allocation1 [shape = 'u32[144,128]{1,0:T(1,128)}', space=vmem, size = 0x12000, scoped, tag = 'internal scratch']
  %s0 = inlined_call_operand.hbm [shape: f32[2,3,32,128], index: 0, kind: input, shape index: {}]
  %s1 = inlined_call_operand.hbm [shape: s8[2,32,128], index: 1, kind: input, shape index: {}]
  %s2 = inlined_call_operand.hbm [shape: f32[2,32,128], index: 2, kind: output, shape index: {}]
  %s3 = sld [smem:[#allocation0]]
  $region49: #{tpu_custom_call.1} parent=0
    _
  %s5 = ssub.s32 1, %s3
  %s6 = scalar_select 0, %s5, %s3
  $region1: #{tpu_custom_call.1} parent=0
    #allocation2 [shape = 'u8[98304]{0}', space=vmem, size = 0x18000, scoped, tag = 'input window, operand 0']
    #allocation3 [shape = 's32[2]{0}', space=sflag, size = 0x8, scoped, tag = 'scoped memory for tpu_custom_call.1']
    #allocation4 [shape = 's32[2]{0}', space=sflag, size = 0x8, scoped, tag = 'scoped memory for tpu_custom_call.1']
    #allocation5 [shape = 'u8[8192]{0}', space=vmem, size = 0x2000, scoped, tag = 'input window, operand 1']
    #allocation6 [shape = 's32[2]{0}', space=sflag, size = 0x8, scoped, tag = 'scoped memory for tpu_custom_call.1']
    #allocation7 [shape = 'u8[32768]{0}', space=vmem, size = 0x8000, scoped, tag = 'output window, operand 0']
    %7 = vsyncpa [#allocation3], 0
    %s8 = scalar_lea.sflag [#allocation3], 1
    %9 = vsyncpa %s8, 0
    %10 = vsyncpa [#allocation6], 0
    %s11 = scalar_lea.sflag [#allocation6], 1
    %12 = vsyncpa %s11, 0
    %13 = vsyncpa [#allocation4], 0
    %s14 = scalar_lea.sflag [#allocation4], 1
    %15 = vsyncpa %s14, 0
    loop: start=0, step=1, limit=4
    $region2: #{tpu_custom_call.1} parent=1 // loop_pre_header
      _
    $region3: #{tpu_custom_call.1} parent=1 // loop_header
      %s17 = sphi 0, %s21
      %p18 = scmp.ge.s32.totalorder %s17, 4
      %s24 = sphi 0, %s36
      %s25 = sphi 0, %s32
      %s26 = sphi 0, %s24
      %s27 = sphi 0, %s25
      %s28 = sphi 0, %s26
      %s29 = sphi 0, %s27
      %s41 = sphi 0, %s43
      %s44 = sphi 0, %s41
      %s45 = sphi 0, %s44
      %s61 = sphi 0, %s45
      %s69 = sphi 0, %s71
      %s72 = sphi 0, %s69
      %s73 = sphi 0, %s72
      %s89 = sphi 0, %s73
      %s97 = sphi 0, %s99
      %s100 = sphi 0, %s97
      %s101 = sphi 0, %s100
      %s117 = sphi 0, %s101
    $region4: #{tpu_custom_call.1} parent=1 // loop_header_branch
      %20 = sbr.rel (%p18) target = $region8
    $region5: #{tpu_custom_call.1} parent=1 // loop_body
      %s22 = ssub.s32 %s17, 1
      %s23 = ssub.s32 %s17, 2
      %s30 = sadd.s32 1, %s25
      %p31 = scmp.ge.s32.totalorder %s30, 1
      %s32 = scalar_select %p31, 0, %s30
      %s33 = sadd.s32 1, %s24
      %s34 = scalar_select %p31, %s33, %s24
      %p35 = scmp.ge.s32.totalorder %s34, 2
      %s36 = scalar_select %p35, 0, %s34
      %s37 = ssub.s32 %s24, %s36
      %s38 = ssub.s32 %s25, %s32
      %s39 = sor.u32 %s37, %s38
      %p40 = scmp.eq.s32.totalorder %s39, 0
      %s42 = sadd.s32 %s41, 1
      %s43 = scalar_select %p40, %s41, %s42
      %p46 = pneg %p40
      %p47 = scmp.eq.s32.totalorder %s17, 1
      %p48 = por %p46, %p47
      %p49 = scmp.ne.s32.totalorder %s41, %s44
      %p50 = scmp.eq.s32.totalorder %s17, 0
      %p51 = por %p49, %p50
      %p52 = scmp.ne.s32.totalorder %s41, %s44
      %p53 = scmp.eq.s32.totalorder %s22, 1
      %p54 = por %p52, %p53
      %p55 = scmp.ne.s32.totalorder %s44, %s45
      %p56 = scmp.eq.s32.totalorder %s22, 0
      %p57 = por %p55, %p56
      %p58 = scmp.ne.s32.totalorder %s44, %s45
      %p59 = scmp.eq.s32.totalorder %s23, 1
      %p60 = por %p58, %p59
      %p62 = scmp.ne.s32.totalorder %s45, %s61
      %p63 = scmp.eq.s32.totalorder %s23, 0
      %p64 = por %p62, %p63
      %s65 = ssub.s32 %s24, %s36
      %s66 = ssub.s32 %s25, %s32
      %s67 = sor.u32 %s65, %s66
      %p68 = scmp.eq.s32.totalorder %s67, 0
      %s70 = sadd.s32 %s69, 1
      %s71 = scalar_select %p68, %s69, %s70
      %p74 = pneg %p68
      %p75 = scmp.eq.s32.totalorder %s17, 1
      %p76 = por %p74, %p75
      %p77 = scmp.ne.s32.totalorder %s69, %s72
      %p78 = scmp.eq.s32.totalorder %s17, 0
      %p79 = por %p77, %p78
      %p80 = scmp.ne.s32.totalorder %s69, %s72
      %p81 = scmp.eq.s32.totalorder %s22, 1
      %p82 = por %p80, %p81
      %p83 = scmp.ne.s32.totalorder %s72, %s73
      %p84 = scmp.eq.s32.totalorder %s22, 0
      %p85 = por %p83, %p84
      %p86 = scmp.ne.s32.totalorder %s72, %s73
      %p87 = scmp.eq.s32.totalorder %s23, 1
      %p88 = por %p86, %p87
      %p90 = scmp.ne.s32.totalorder %s73, %s89
      %p91 = scmp.eq.s32.totalorder %s23, 0
      %p92 = por %p90, %p91
      %s93 = ssub.s32 %s24, %s36
      %s94 = ssub.s32 %s25, %s32
      %s95 = sor.u32 %s93, %s94
      %p96 = scmp.eq.s32.totalorder %s95, 0
      %s98 = sadd.s32 %s97, 1
      %s99 = scalar_select %p96, %s97, %s98
      %p102 = pneg %p96
      %p103 = scmp.eq.s32.totalorder %s17, 1
      %p104 = por %p102, %p103
      %p105 = scmp.ne.s32.totalorder %s97, %s100
      %p106 = scmp.eq.s32.totalorder %s17, 0
      %p107 = por %p105, %p106
      %p108 = scmp.ne.s32.totalorder %s97, %s100
      %p109 = scmp.eq.s32.totalorder %s22, 1
      %p110 = por %p108, %p109
      %p111 = scmp.ne.s32.totalorder %s100, %s101
      %p112 = scmp.eq.s32.totalorder %s22, 0
      %p113 = por %p111, %p112
      %p114 = scmp.ne.s32.totalorder %s100, %s101
      %p115 = scmp.eq.s32.totalorder %s23, 1
      %p116 = por %p114, %p115
      %p118 = scmp.ne.s32.totalorder %s101, %s117
      %p119 = scmp.eq.s32.totalorder %s23, 0
      %p120 = por %p118, %p119
      %p121 = scmp.le.s32.totalorder 1, %s17
      %p122 = scmp.lt.s32.totalorder %s17, 3
      %p123 = pnand %p121, %p122
      %p124 = pneg %p123
      // Predicated region
      $region9: #{tpu_custom_call.1} parent=5 // pred_check
        _
      $region10: #{tpu_custom_call.1} parent=5 // pred_check_branch
        %126 = sbr.rel (%p123) target = $region12
      $region11: #{tpu_custom_call.1} parent=5 // pred_region
        %s127 = ssub.s32 %s17, 1
      $region12: #{tpu_custom_call.1} parent=5 // pred_fallthru
        _
      %p128 = scmp.lt.s32.totalorder %s17, 2
      // Predicated region
      $region13: #{tpu_custom_call.1} parent=5 // pred_check
        %p129 = pneg %p128
      $region14: #{tpu_custom_call.1} parent=5 // pred_check_branch
        %131 = sbr.rel (%p129) target = $region16
      $region15: #{tpu_custom_call.1} parent=5 // pred_region
        // Predicated region
        $region17: #{tpu_custom_call.1} parent=15 // pred_check
          %p132 = pneg %p51
        $region18: #{tpu_custom_call.1} parent=15 // pred_check_branch
          %134 = sbr.rel (%p132) target = $region20
        $region19: #{tpu_custom_call.1} parent=15 // pred_region
          %s135 = sand.u32 %s41, 1
          %s136 = scalar_lea.sflag [#allocation3], %s135
          %s137 = sand.u32 %s41, 1
          %s138 = smul.addr %s137, 96
          %s139 = scalar_lea.vmem [#allocation2], %s138
          %s140 = smul.u32 4, %s25
          %s142 = ssub.s32 1536, 1536
          %143 = vsyncadd %s136, %s142
          %s144 = smul.addr %s24, 12
          %s145 = sadd.s32 %s140, %s144
          %s146 = smul.addr %s145, 128
          %s147 = scalar_lea.hbm %s0, %s146
          %s148 = sshll.u32 %s139, 4
          %s149 = int_to_ptr.vmem [resolvable:$true] %s148
          %154 = dma.hbm_to_vmem [thread:$0]  %s147, 1536, %s149, %s136, 128, 128, 8
        $region20: #{tpu_custom_call.1} parent=15 // pred_fallthru
          _
        // Predicated region
        $region21: #{tpu_custom_call.1} parent=15 // pred_check
          %p155 = pneg %p79
        $region22: #{tpu_custom_call.1} parent=15 // pred_check_branch
          %157 = sbr.rel (%p155) target = $region24
        $region23: #{tpu_custom_call.1} parent=15 // pred_region
          %s158 = sand.u32 %s69, 1
          %s159 = scalar_lea.sflag [#allocation6], %s158
          %s160 = sand.u32 %s69, 1
          %s161 = smul.addr %s160, 8
          %s162 = scalar_lea.vmem [#allocation5], %s161
          %s164 = ssub.s32 128, 128
          %165 = vsyncadd %s159, %s164
          %s166 = sadd.s32 %s25, %s24
          %s167 = smul.addr %s166, 128
          %s168 = scalar_lea.hbm %s1, %s167
          %s170 = sshll.u32 %s162, 4
          %s171 = int_to_ptr.vmem [resolvable:$true] %s170
          %173 = dma.hbm_to_vmem [thread:$0]  %s168, 128, %s171, %s159
        $region24: #{tpu_custom_call.1} parent=15 // pred_fallthru
          _
      $region16: #{tpu_custom_call.1} parent=5 // pred_fallthru
        _
      %p174 = scmp.le.s32.totalorder 1, %s17
      %p175 = scmp.lt.s32.totalorder %s17, 3
      %p176 = pnand %p174, %p175
      %p177 = pneg %p176
      // Predicated region
      $region25: #{tpu_custom_call.1} parent=5 // pred_check
        _
      $region26: #{tpu_custom_call.1} parent=5 // pred_check_branch
        %179 = sbr.rel (%p176) target = $region28
      $region27: #{tpu_custom_call.1} parent=5 // pred_region
        %s180 = ssub.s32 %s17, 1
        %s181 = sand.u32 %s44, 1
        %s182 = scalar_lea.sflag [#allocation3], %s181
        %s183 = sand.u32 %s44, 1
        %s184 = smul.addr %s183, 96
        %s185 = scalar_lea.vmem [#allocation2], %s184
        // Predicated region
        $region29: #{tpu_custom_call.1} parent=27 // pred_check
          %p186 = pneg %p57
        $region30: #{tpu_custom_call.1} parent=27 // pred_check_branch
          %188 = sbr.rel (%p186) target = $region32
        $region31: #{tpu_custom_call.1} parent=27 // pred_region
          %189 = dma.done %s182, 1536
        $region32: #{tpu_custom_call.1} parent=27 // pred_fallthru
          _
        %s190 = sand.u32 %s72, 1
        %s191 = scalar_lea.sflag [#allocation6], %s190
        %s192 = sand.u32 %s72, 1
        %s193 = smul.addr %s192, 8
        %s194 = scalar_lea.vmem [#allocation5], %s193
        // Predicated region
        $region33: #{tpu_custom_call.1} parent=27 // pred_check
          %p195 = pneg %p85
        $region34: #{tpu_custom_call.1} parent=27 // pred_check_branch
          %197 = sbr.rel (%p195) target = $region36
        $region35: #{tpu_custom_call.1} parent=27 // pred_region
          %198 = dma.done %s191, 128
        $region36: #{tpu_custom_call.1} parent=27 // pred_fallthru
          _
        %s199 = sand.u32 %s44, 1
        %s200 = scalar_lea.sflag [#allocation3], %s199
        %s201 = sand.u32 %s44, 1
        %s202 = smul.addr %s201, 96
        %s203 = scalar_lea.vmem [#allocation2], %s202
        %p204 = pneg %p57
        %p205 = pneg %p54
        %s206 = sand.u32 %s72, 1
        %s207 = scalar_lea.sflag [#allocation6], %s206
        %s208 = sand.u32 %s72, 1
        %s209 = smul.addr %s208, 8
        %s210 = scalar_lea.vmem [#allocation5], %s209
        %p211 = pneg %p85
        %p212 = pneg %p82
        %p213 = pneg %p113
        %p214 = pneg %p110
        %s215 = sand.u32 %s100, 1
        %s216 = scalar_lea.sflag [#allocation4], %s215
        %s217 = sand.u32 %s100, 1
        %s218 = smul.addr %s217, 32
        %s219 = scalar_lea.vmem [#allocation7], %s218
        %s220 = smul.u32 4, %s27
        %s221 = smul.u32 4, %s27
        %v222 = vld [vmem:[%s194] sm:$0xff]
        %v223 = vunpack.c.0.s8 %v222
        %v224 = vunpack.c.1.s8 %v222
        %v225 = vunpack.c.2.s8 %v222
        %v226 = vunpack.c.3.s8 %v222
        %v227 = vld [vmem:[%s185] sm:$0xff]
        %v228 = vld [vmem:[%s185 + $0x8] sm:$0xff]
        %v229 = vld [vmem:[%s185 + $0x10] sm:$0xff]
        %v230 = vld [vmem:[%s185 + $0x18] sm:$0xff]
        %s231 = scalar_lea.vmem %s185, 32 [#allocation2]
        %v232 = vld [vmem:[%s231] sm:$0xff]
        %v233 = vld [vmem:[%s231 + $0x8] sm:$0xff]
        %v234 = vld [vmem:[%s231 + $0x10] sm:$0xff]
        %v235 = vld [vmem:[%s231 + $0x18] sm:$0xff]
        %s236 = scalar_lea.vmem %s185, 64 [#allocation2]
        %v237 = vld [vmem:[%s236] sm:$0xff]
        %v238 = vld [vmem:[%s236 + $0x8] sm:$0xff]
        %v239 = vld [vmem:[%s236 + $0x10] sm:$0xff]
        %v240 = vld [vmem:[%s236 + $0x18] sm:$0xff]
        %v241 = vmax.f32 %v227, %v232
        %v242 = vmax.f32 %v228, %v233
        %v243 = vmax.f32 %v229, %v234
        %v244 = vmax.f32 %v230, %v235
        %v245 = vmax.f32 %v241, %v237
        %v246 = vmax.f32 %v242, %v238
        %v247 = vmax.f32 %v243, %v239
        %v248 = vmax.f32 %v244, %v240
        %v249 = vsub.f32 %v227, %v245
        %v250 = vsub.f32 %v228, %v246
        %v251 = vsub.f32 %v229, %v247
        %v252 = vsub.f32 %v230, %v248
        %v253 = vmul.f32 %v249, 1.442695
        %v254 = vpow.pop %v253
        %v255 = vmul.f32 %v250, 1.442695
        %v256 = vpow.pop %v255
        %v257 = vmul.f32 %v251, 1.442695
        %v258 = vpow.pop %v257
        %v259 = vmul.f32 %v252, 1.442695
        %v260 = vpow.pop %v259
        %v261 = vsub.f32 %v232, %v245
        %v262 = vsub.f32 %v233, %v246
        %v263 = vsub.f32 %v234, %v247
        %v264 = vsub.f32 %v235, %v248
        %v265 = vmul.f32 %v261, 1.442695
        %v266 = vpow.pop %v265
        %v267 = vmul.f32 %v262, 1.442695
        %v268 = vpow.pop %v267
        %v269 = vmul.f32 %v263, 1.442695
        %v270 = vpow.pop %v269
        %v271 = vmul.f32 %v264, 1.442695
        %v272 = vpow.pop %v271
        %v273 = vsub.f32 %v237, %v245
        %v274 = vsub.f32 %v238, %v246
        %v275 = vsub.f32 %v239, %v247
        %v276 = vsub.f32 %v240, %v248
        %v277 = vmul.f32 %v273, 1.442695
        %v278 = vpow.pop %v277
        %v279 = vmul.f32 %v274, 1.442695
        %v280 = vpow.pop %v279
        %v281 = vmul.f32 %v275, 1.442695
        %v282 = vpow.pop %v281
        %v283 = vmul.f32 %v276, 1.442695
        %v284 = vpow.pop %v283
        %v285 = vadd.f32 %v254, %v266
        %v286 = vadd.f32 %v256, %v268
        %v287 = vadd.f32 %v258, %v270
        %v288 = vadd.f32 %v260, %v272
        %v289 = vadd.f32 %v285, %v278
        %v290 = vadd.f32 %v286, %v280
        %v291 = vadd.f32 %v287, %v282
        %v292 = vadd.f32 %v288, %v284
        %vm293 = vcmp.eq.s32.totalorder %v223, 1
        %vm294 = vcmp.eq.s32.totalorder %v224, 1
        %vm295 = vcmp.eq.s32.totalorder %v225, 1
        %vm296 = vcmp.eq.s32.totalorder %v226, 1
        %v297 = vsel %vm293, %v266, %v254
        %v298 = vsel %vm294, %v268, %v256
        %v299 = vsel %vm295, %v270, %v258
        %v300 = vsel %vm296, %v272, %v260
        %v301 = vsel %vm293, 0.5, 0.25
        %v302 = vsel %vm294, 0.5, 0.25
        %v303 = vsel %vm295, 0.5, 0.25
        %v304 = vsel %vm296, 0.5, 0.25
        %vm305 = vcmp.eq.s32.totalorder %v223, 2
        %vm306 = vcmp.eq.s32.totalorder %v224, 2
        %vm307 = vcmp.eq.s32.totalorder %v225, 2
        %vm308 = vcmp.eq.s32.totalorder %v226, 2
        %v309 = vsel %vm305, %v278, %v297
        %v310 = vsel %vm306, %v280, %v298
        %v311 = vsel %vm307, %v282, %v299
        %v312 = vsel %vm308, %v284, %v300
        %v313 = vsel %vm305, 0.25, %v301
        %v314 = vsel %vm306, 0.25, %v302
        %v315 = vsel %vm307, 0.25, %v303
        %v316 = vsel %vm308, 0.25, %v304
        %v317 = vrcp.pop %v289
        %v318 = vmul.f32 %v309, %v317
        %v319 = vrcp.pop %v290
        %v320 = vmul.f32 %v310, %v319
        %v321 = vrcp.pop %v291
        %v322 = vmul.f32 %v311, %v321
        %v323 = vrcp.pop %v292
        %v324 = vmul.f32 %v312, %v323
        %v325 = vmax.f32 %v318, 1e-08
        %v326 = vmax.f32 %v320, 1e-08
        %v327 = vmax.f32 %v322, 1e-08
        %v328 = vmax.f32 %v324, 1e-08
        %v329 = vmin.f32 %v325, 1.0
        %v330 = vmin.f32 %v326, 1.0
        %v331 = vmin.f32 %v327, 1.0
        %v332 = vmin.f32 %v328, 1.0
        %v333 = vsub.f32 1.0, %v329
        %v334 = vsub.f32 1.0, %v330
        %v335 = vsub.f32 1.0, %v331
        %v336 = vsub.f32 1.0, %v332
        %v337 = vmul.f32 %v333, %v333
        %v338 = vmul.f32 %v334, %v334
        %v339 = vmul.f32 %v335, %v335
        %v340 = vmul.f32 %v336, %v336
        %v341 = vsub.f32 0.0, %v313
        %v342 = vsub.f32 0.0, %v314
        %v343 = vsub.f32 0.0, %v315
        %v344 = vsub.f32 0.0, %v316
        %v345 = vmul.f32 %v341, %v337
        %v346 = vmul.f32 %v342, %v338
        %v347 = vmul.f32 %v343, %v339
        %v348 = vmul.f32 %v344, %v340
        %v349 = vlog2.pop %v329
        %v350 = vmul.f32 %v349, 0.6931472
        %v351 = vlog2.pop %v330
        %v352 = vmul.f32 %v351, 0.6931472
        %v353 = vlog2.pop %v331
        %v354 = vmul.f32 %v353, 0.6931472
        %v355 = vlog2.pop %v332
        %v356 = vmul.f32 %v355, 0.6931472
        %v357 = vmul.f32 %v345, %v350
        %v358 = vmul.f32 %v346, %v352
        %v359 = vmul.f32 %v347, %v354
        %v360 = vmul.f32 %v348, %v356
        %361 = vst [vmem:[%s219] sm:$0xff] %v357
        %362 = vst [vmem:[%s219 + $0x8] sm:$0xff] %v358
        %363 = vst [vmem:[%s219 + $0x10] sm:$0xff] %v359
        %364 = vst [vmem:[%s219 + $0x18] sm:$0xff] %v360
        %s365 = sand.u32 %s100, 1
        %s366 = scalar_lea.sflag [#allocation4], %s365
        %s367 = sand.u32 %s100, 1
        %s368 = smul.addr %s367, 32
        %s369 = scalar_lea.vmem [#allocation7], %s368
        // Predicated region
        $region37: #{tpu_custom_call.1} parent=27 // pred_check
          %p370 = pneg %p110
        $region38: #{tpu_custom_call.1} parent=27 // pred_check_branch
          %372 = sbr.rel (%p370) target = $region40
        $region39: #{tpu_custom_call.1} parent=27 // pred_region
          %s373 = smul.u32 4, %s27
          %s375 = ssub.s32 512, 512
          %376 = vsyncadd %s366, %s375
          %s377 = smul.addr %s26, 4
          %s378 = sadd.s32 %s373, %s377
          %s379 = smul.addr %s378, 128
          %s380 = scalar_lea.hbm %s2, %s379
          %s381 = sshll.u32 %s369, 4
          %s382 = int_to_ptr.vmem [resolvable:$true] %s381
          %387 = dma.vmem_to_hbm [thread:$0]  %s382, 512, %s380, %s366, 128, 128, 8
        $region40: #{tpu_custom_call.1} parent=27 // pred_fallthru
          _
      $region28: #{tpu_custom_call.1} parent=5 // pred_fallthru
        _
      %p388 = scmp.le.s32.totalorder 2, %s17
      // Predicated region
      $region41: #{tpu_custom_call.1} parent=5 // pred_check
        %p389 = pneg %p388
      $region42: #{tpu_custom_call.1} parent=5 // pred_check_branch
        %391 = sbr.rel (%p389) target = $region44
      $region43: #{tpu_custom_call.1} parent=5 // pred_region
        %s392 = ssub.s32 %s17, 2
        // Predicated region
        $region45: #{tpu_custom_call.1} parent=43 // pred_check
          %p393 = pneg %p116
        $region46: #{tpu_custom_call.1} parent=43 // pred_check_branch
          %395 = sbr.rel (%p393) target = $region48
        $region47: #{tpu_custom_call.1} parent=43 // pred_region
          %s396 = sand.u32 %s101, 1
          %s397 = scalar_lea.sflag [#allocation4], %s396
          %s398 = sand.u32 %s101, 1
          %s399 = smul.addr %s398, 32
          %s400 = scalar_lea.vmem [#allocation7], %s399
          %401 = dma.done %s397, 512
        $region48: #{tpu_custom_call.1} parent=43 // pred_fallthru
          _
      $region44: #{tpu_custom_call.1} parent=5 // pred_fallthru
        _
    $region6: #{tpu_custom_call.1} parent=1 // loop_footer
      %s21 = sadd.s32 1, %s17
    $region7: #{tpu_custom_call.1} parent=1 // loop_footer_branch
      %16 = sbr.rel target = $region3
    $region8: #{tpu_custom_call.1} parent=1 // loop_exit
      _
    %402 = vsyncpa [#allocation3], 1
    %s403 = scalar_lea.sflag [#allocation3], 1
    %404 = vsyncpa %s403, 1
    %405 = vsyncpa [#allocation6], 1
    %s406 = scalar_lea.sflag [#allocation6], 1
    %407 = vsyncpa %s406, 1
    %408 = vsyncpa [#allocation4], 1
    %s409 = scalar_lea.sflag [#allocation4], 1
    %410 = vsyncpa %s409, 1

</llo_original>
